<compile_context>
chip_gen: v6e
topology: v6e:2x2x1
jax: 0.10.0
libtpu: 0.0.40
codegen_flags: <defaults>
</compile_context>

<pallas_src>
import jax
import jax.numpy as jnp
from jax.experimental import pallas as pl
from jax.experimental.pallas import tpu as pltpu


GAMMA = 2.0
NUM_CLASSES = 3
_LANES = 128          # vreg lane width
_SUBLANES = 8         # f32 native sublane tile
_ROW_ALIGN = 32       # int8 labels pack 32 rows per native tile -> row tiles are x32
_DEFAULT_TILE_R = 512 # dense rows per grid step (512*128 = 64K samples / ~0.8 MiB f32 preds)


def _focal_loss_kernel(preds_ref, labels_ref, alpha_ref, out_ref):
    """One grid step over TILE_R * 128 samples.

    preds_ref : (C, TILE_R, 128) input dtype, VMEM  (dense per-class planes)
    labels_ref: (TILE_R, 128)    int8,  VMEM        (padding rows carry label == C)
    alpha_ref : (C,)             f32,   SMEM
    out_ref   : (8, 128)         f32,   VMEM        (per-tile partial sums)
    """
    C = preds_ref.shape[0]
    x = preds_ref[...].astype(jnp.float32)        # (C, TILE_R, 128)
    y = labels_ref[...].astype(jnp.int32)         # (TILE_R, 128)

    # Numerically-stable softmax pieces over the static, unrolled class planes.
    planes = [x[c] for c in range(C)]             # each (TILE_R, 128), dense
    m = planes[0]
    for c in range(1, C):
        m = jnp.maximum(m, planes[c])
    exps = [jnp.exp(p - m) for p in planes]
    denom = exps[0]
    for c in range(1, C):
        denom = denom + exps[c]
    lse = jnp.log(denom)

    # "Gather" log p_y / p_y / alpha[y] via selects (C is tiny and static).
    # Padded rows have label == C (out of range): no select fires, so
    # alpha_g stays 0 -> zero loss; no explicit remainder mask needed.
    logp = (planes[C - 1] - m) - lse
    p_num = exps[C - 1]
    alpha_g = jnp.zeros_like(logp)
    for c in range(C - 1, -1, -1):
        sel = y == c
        if c < C - 1:
            logp = jnp.where(sel, (planes[c] - m) - lse, logp)
            p_num = jnp.where(sel, exps[c], p_num)
        alpha_g = jnp.where(sel, alpha_ref[c], alpha_g)

    p = p_num / denom                             # reuse exps/denom: no extra exp
    w = 1.0 - p                                   # gamma == 2 -> explicit square
    loss = -alpha_g * (w * w) * logp              # (TILE_R, 128)

    # Fold TILE_R sublanes down to one native (8, 128) tile of partial sums
    # with aligned strided adds (static, unrolled; no reshape needed).
    tile_r = loss.shape[0]
    psum = loss[0:_SUBLANES, :]
    for r0 in range(_SUBLANES, tile_r, _SUBLANES):
        psum = psum + loss[r0:r0 + _SUBLANES, :]
    out_ref[...] = psum


def focal_loss_pallas(preds, labels, alpha=None, gamma=GAMMA, reduction="mean",
                      tile_r=_DEFAULT_TILE_R):
    """preds: (..., C) float; labels: (...) int; alpha: (C,) float or None."""
    assert gamma == GAMMA, "gamma is baked into the kernel as an explicit square"
    assert reduction in ("mean", "sum")
    C = preds.shape[-1]
    if alpha is None:
        alpha = jnp.ones((C,), dtype=jnp.float32)
    alpha = jnp.asarray(alpha, dtype=jnp.float32).reshape(C)

    preds2d = preds.reshape(-1, C)                # (N, C), keep input dtype
    labels1d = labels.reshape(-1)                 # (N,)
    N = preds2d.shape[0]

    # Dense layout: samples run over (rows, 128) = (sublanes, lanes).
    rows = pl.cdiv(N, _LANES)
    rows_min = pl.cdiv(rows, _ROW_ALIGN) * _ROW_ALIGN
    tile_r = max(_ROW_ALIGN, (tile_r // _ROW_ALIGN) * _ROW_ALIGN)
    tile_r = min(tile_r, rows_min)
    rows_pad = pl.cdiv(rows, tile_r) * tile_r
    n_pad = rows_pad * _LANES
    grid_n = rows_pad // tile_r

    # Relayout: class planes become dense (rows_pad, 128) slabs; labels become
    # int8 padded with the out-of-range value C (-> zero loss, no mask).
    # TODO(synk): produce preds directly in (C, rows, 128) layout upstream (or
    #             fuse this transpose+pad with the producer inside one jit) —
    #             otherwise it is an extra HBM pass on preds.
    preds_t = jnp.pad(preds2d.T, ((0, 0), (0, n_pad - N)))
    preds_t = preds_t.reshape(C, rows_pad, _LANES)
    labels_t = jnp.pad(labels1d.astype(jnp.int8), (0, n_pad - N),
                       constant_values=C).reshape(rows_pad, _LANES)

    # Explicit VMEM budget: double-buffered input blocks + live f32 temporaries.
    block_in = (C * tile_r * _LANES * preds_t.dtype.itemsize
                + tile_r * _LANES * labels_t.dtype.itemsize)
    temps = 16 * tile_r * _LANES * 4
    vmem_limit = int(min(64 << 20, max(16 << 20, 2 * block_in + temps + (2 << 20))))

    cost = pl.CostEstimate(
        flops=30 * n_pad,
        transcendentals=(C + 1) * n_pad,
        bytes_accessed=(preds_t.size * preds_t.dtype.itemsize
                        + labels_t.size
                        + grid_n * _SUBLANES * _LANES * 4),
    )

    partial = pl.pallas_call(
        _focal_loss_kernel,
        out_shape=jax.ShapeDtypeStruct((grid_n * _SUBLANES, _LANES), jnp.float32),
        grid=(grid_n,),
        in_specs=[
            pl.BlockSpec((C, tile_r, _LANES), lambda i: (0, i, 0)),   # preds
            pl.BlockSpec((tile_r, _LANES), lambda i: (i, 0)),         # labels (int8)
            pl.BlockSpec(memory_space=pltpu.SMEM),                    # alpha (C,)
        ],
        out_specs=pl.BlockSpec((_SUBLANES, _LANES), lambda i: (i, 0)),
        compiler_params=pltpu.CompilerParams(
            dimension_semantics=("parallel",),
            vmem_limit_bytes=vmem_limit,
        ),
        cost_estimate=cost,
    )(preds_t, labels_t, alpha)

    total = jnp.sum(partial)                      # tiny (grid_n*8, 128) reduce
    if reduction == "mean":
        return total / jnp.float32(N)
    return total


def focal_loss_ref(preds, labels, alpha, gamma=GAMMA, reduction="mean"):
    """Pure-JAX reference mirroring the PyTorch module."""
    C = preds.shape[-1]
    x = preds.reshape(-1, C).astype(jnp.float32)
    y = labels.reshape(-1).astype(jnp.int32)
    logsoft = jax.nn.log_softmax(x, axis=1)
    logp = jnp.take_along_axis(logsoft, y[:, None], axis=1)[:, 0]
    p = jnp.exp(logp)
    a = alpha[y]
    loss = -a * jnp.power(1.0 - p, gamma) * logp
    return jnp.mean(loss) if reduction == "mean" else jnp.sum(loss)


if __name__ == "__main__":
    key = jax.random.PRNGKey(0)
    k1, k2, k3, k4 = jax.random.split(key, 4)
    C = NUM_CLASSES

    # Case 1: module-default alpha; N = 300 is deliberately not a multiple of 128.
    B, S = 2, 150
    preds1 = jax.random.normal(k1, (B, S, C), dtype=jnp.float32)
    labels1 = jax.random.randint(k2, (B, S), 0, C, dtype=jnp.int32)
    alpha1 = jnp.ones((C,), dtype=jnp.float32)            # alpha=None in the module
    ref1 = focal_loss_ref(preds1, labels1, alpha1)
    out1 = jax.block_until_ready(focal_loss_pallas(preds1, labels1))
    assert jnp.allclose(out1, ref1, rtol=1e-5, atol=1e-5), (out1, ref1)

    # Case 2: multi-tile "parallel" grid (forced small row tile), non-uniform
    # alpha, both mean and sum reductions.
    B2, S2 = 4, 2048
    preds2 = jax.random.normal(k3, (B2, S2, C), dtype=jnp.float32)
    labels2 = jax.random.randint(k4, (B2, S2), 0, C, dtype=jnp.int32)
    alpha2 = jnp.asarray([0.25, 0.5, 0.25], dtype=jnp.float32)
    ref2m = focal_loss_ref(preds2, labels2, alpha2, reduction="mean")
    ref2s = focal_loss_ref(preds2, labels2, alpha2, reduction="sum")
    out2m = jax.block_until_ready(
        focal_loss_pallas(preds2, labels2, alpha2, reduction="mean", tile_r=32))
    out2s = jax.block_until_ready(
        focal_loss_pallas(preds2, labels2, alpha2, reduction="sum"))
    assert jnp.allclose(out2m, ref2m, rtol=1e-5, atol=1e-5), (out2m, ref2m)
    assert jnp.allclose(out2s, ref2s, rtol=2e-5, atol=1e-4), (out2s, ref2s)

    print("KERNEL_OK")
</pallas_src>

<mosaic_0001>
module attributes {stable_mosaic.version = 11 : i64} {
  func.func @_focal_loss_kernel(%arg0: i32, %arg1: memref<3x32x128xf32, #tpu.memory_space<vmem>>, %arg2: memref<32x128xi8, #tpu.memory_space<vmem>>, %arg3: memref<3xf32, #tpu.memory_space<smem>>, %arg4: memref<8x128xf32, #tpu.memory_space<vmem>>) attributes {dimension_semantics = [#tpu.dimension_semantics<parallel>], iteration_bounds = array<i64: 1>, scalar_prefetch = 0 : i64, scratch_operands = 0 : i64, tpu.core_type = #tpu.core_type<tc>, window_params = [{transform_indices = @transform_0, window_bounds = array<i64: 3, 32, 128>}, {transform_indices = @transform_1, window_bounds = array<i64: 32, 128>}, {transform_indices = @transform_2, window_bounds = array<i64: 3>}, {transform_indices = @transform_3, window_bounds = array<i64: 8, 128>}]} {
    %c0 = arith.constant 0 : index
    %c0_0 = arith.constant 0 : index
    %c0_1 = arith.constant 0 : index
    %0 = vector.load %arg1[%c0, %c0_0, %c0_1] : memref<3x32x128xf32, #tpu.memory_space<vmem>>, vector<3x32x128xf32>
    %c0_2 = arith.constant 0 : index
    %c0_3 = arith.constant 0 : index
    %1 = vector.load %arg2[%c0_2, %c0_3] : memref<32x128xi8, #tpu.memory_space<vmem>>, vector<32x128xi8>
    %2 = arith.extsi %1 : vector<32x128xi8> to vector<32x128xi32>
    %3 = vector.extract_strided_slice %0 {offsets = [0, 0, 0], sizes = [1, 32, 128], strides = [1, 1, 1]} : vector<3x32x128xf32> to vector<1x32x128xf32>
    %4 = vector.shape_cast %3 : vector<1x32x128xf32> to vector<32x128xf32>
    %5 = vector.extract_strided_slice %0 {offsets = [1, 0, 0], sizes = [1, 32, 128], strides = [1, 1, 1]} : vector<3x32x128xf32> to vector<1x32x128xf32>
    %6 = vector.shape_cast %5 : vector<1x32x128xf32> to vector<32x128xf32>
    %7 = vector.extract_strided_slice %0 {offsets = [2, 0, 0], sizes = [1, 32, 128], strides = [1, 1, 1]} : vector<3x32x128xf32> to vector<1x32x128xf32>
    %8 = vector.shape_cast %7 : vector<1x32x128xf32> to vector<32x128xf32>
    %9 = arith.maximumf %4, %6 : vector<32x128xf32>
    %10 = arith.maximumf %9, %8 : vector<32x128xf32>
    %11 = arith.subf %4, %10 : vector<32x128xf32>
    %12 = math.exp %11 : vector<32x128xf32>
    %13 = arith.subf %6, %10 : vector<32x128xf32>
    %14 = math.exp %13 : vector<32x128xf32>
    %15 = arith.subf %8, %10 : vector<32x128xf32>
    %16 = math.exp %15 : vector<32x128xf32>
    %17 = arith.addf %12, %14 : vector<32x128xf32>
    %18 = arith.addf %17, %16 : vector<32x128xf32>
    %19 = math.log %18 : vector<32x128xf32>
    %20 = arith.subf %8, %10 : vector<32x128xf32>
    %21 = arith.subf %20, %19 : vector<32x128xf32>
    %cst = arith.constant 0.000000e+00 : f32
    %22 = vector.broadcast %cst : f32 to vector<32x128xf32>
    %c2_i32 = arith.constant 2 : i32
    %23 = vector.broadcast %c2_i32 : i32 to vector<32x128xi32>
    %24 = arith.cmpi eq, %2, %23 : vector<32x128xi32>
    %c2 = arith.constant 2 : index
    %25 = memref.load %arg3[%c2] : memref<3xf32, #tpu.memory_space<smem>>
    %26 = vector.broadcast %25 : f32 to vector<32x128xf32>
    %27 = arith.select %24, %26, %22 : vector<32x128xi1>, vector<32x128xf32>
    %c1_i32 = arith.constant 1 : i32
    %28 = vector.broadcast %c1_i32 : i32 to vector<32x128xi32>
    %29 = arith.cmpi eq, %2, %28 : vector<32x128xi32>
    %30 = arith.subf %6, %10 : vector<32x128xf32>
    %31 = arith.subf %30, %19 : vector<32x128xf32>
    %32 = arith.select %29, %31, %21 : vector<32x128xi1>, vector<32x128xf32>
    %33 = arith.select %29, %14, %16 : vector<32x128xi1>, vector<32x128xf32>
    %c1 = arith.constant 1 : index
    %34 = memref.load %arg3[%c1] : memref<3xf32, #tpu.memory_space<smem>>
    %35 = vector.broadcast %34 : f32 to vector<32x128xf32>
    %36 = arith.select %29, %35, %27 : vector<32x128xi1>, vector<32x128xf32>
    %c0_i32 = arith.constant 0 : i32
    %37 = vector.broadcast %c0_i32 : i32 to vector<32x128xi32>
    %38 = arith.cmpi eq, %2, %37 : vector<32x128xi32>
    %39 = arith.subf %4, %10 : vector<32x128xf32>
    %40 = arith.subf %39, %19 : vector<32x128xf32>
    %41 = arith.select %38, %40, %32 : vector<32x128xi1>, vector<32x128xf32>
    %42 = arith.select %38, %12, %33 : vector<32x128xi1>, vector<32x128xf32>
    %c0_4 = arith.constant 0 : index
    %43 = memref.load %arg3[%c0_4] : memref<3xf32, #tpu.memory_space<smem>>
    %44 = vector.broadcast %43 : f32 to vector<32x128xf32>
    %45 = arith.select %38, %44, %36 : vector<32x128xi1>, vector<32x128xf32>
    %46 = arith.divf %42, %18 : vector<32x128xf32>
    %cst_5 = arith.constant 1.000000e+00 : f32
    %47 = vector.broadcast %cst_5 : f32 to vector<32x128xf32>
    %48 = arith.subf %47, %46 : vector<32x128xf32>
    %cst_6 = arith.constant 0.000000e+00 : f32
    %49 = vector.broadcast %cst_6 : f32 to vector<32x128xf32>
    %50 = arith.subf %49, %45 : vector<32x128xf32>
    %51 = arith.mulf %48, %48 : vector<32x128xf32>
    %52 = arith.mulf %50, %51 : vector<32x128xf32>
    %53 = arith.mulf %52, %41 : vector<32x128xf32>
    %54 = vector.extract_strided_slice %53 {offsets = [0, 0], sizes = [8, 128], strides = [1, 1]} : vector<32x128xf32> to vector<8x128xf32>
    %55 = vector.extract_strided_slice %53 {offsets = [8, 0], sizes = [8, 128], strides = [1, 1]} : vector<32x128xf32> to vector<8x128xf32>
    %56 = arith.addf %54, %55 : vector<8x128xf32>
    %57 = vector.extract_strided_slice %53 {offsets = [16, 0], sizes = [8, 128], strides = [1, 1]} : vector<32x128xf32> to vector<8x128xf32>
    %58 = arith.addf %56, %57 : vector<8x128xf32>
    %59 = vector.extract_strided_slice %53 {offsets = [24, 0], sizes = [8, 128], strides = [1, 1]} : vector<32x128xf32> to vector<8x128xf32>
    %60 = arith.addf %58, %59 : vector<8x128xf32>
    %c0_7 = arith.constant 0 : index
    %c0_8 = arith.constant 0 : index
    %61 = vector.load %arg4[%c0_7, %c0_8] : memref<8x128xf32, #tpu.memory_space<vmem>>, vector<8x128xf32>
    tpu.vector_store %arg4[%c0_7, %c0_8], %60 {strides = array<i32>} : memref<8x128xf32, #tpu.memory_space<vmem>>, vector<8x128xf32>,
    return
  }
  func.func @transform_0(%arg0: i32) -> (i32, i32, i32) {
    %c0_i32 = arith.constant 0 : i32
    %c0_i32_0 = arith.constant 0 : i32
    %c0_i32_1 = arith.constant 0 : i32
    return %c0_i32, %arg0, %c0_i32_0 : i32, i32, i32
  }
  func.func @transform_1(%arg0: i32) -> (i32, i32) {
    %c0_i32 = arith.constant 0 : i32
    %c0_i32_0 = arith.constant 0 : i32
    return %arg0, %c0_i32 : i32, i32
  }
  func.func @transform_2(%arg0: i32) -> i32 {
    %c0_i32 = arith.constant 0 : i32
    %c0_i32_0 = arith.constant 0 : i32
    return %c0_i32 : i32
  }
  func.func @transform_3(%arg0: i32) -> (i32, i32) {
    %c0_i32 = arith.constant 0 : i32
    %c0_i32_0 = arith.constant 0 : i32
    return %arg0, %c0_i32 : i32, i32
  }
}

</mosaic_0001>

<llo_original>
// kernel: tpu_custom_call.1
$region0: #{tpu_custom_call.1}
  #allocation0 [shape = 'u32[]', space=smem, size = 0x4, offset = 0x4, fixed_abs, tag = 'smem constant byte address 0x4 - core index']
  #allocation1 [shape = 'u32[144,128]{1,0:T(1,128)}', space=vmem, size = 0x12000, scoped, tag = 'internal scratch']
  %s0 = inlined_call_operand.hbm [shape: f32[3,32,128], index: 0, kind: input, shape index: {}]
  %s1 = inlined_call_operand.hbm [shape: s8[32,128], index: 1, kind: input, shape index: {}]
  %s2 = inlined_call_operand.vmem [shape: f32[3], index: 2, kind: input, shape index: {}]
  %s3 = inlined_call_operand.hbm [shape: f32[8,128], index: 3, kind: output, shape index: {}]
  %s4 = sld [smem:[#allocation0]]
  $region34: #{tpu_custom_call.1} parent=0
    _
  %s6 = ssub.s32 1, %s4
  %s7 = scalar_select 0, %s6, %s4
  $region1: #{tpu_custom_call.1} parent=0
    #allocation2 [shape = 'u8[49152]{0}', space=vmem, size = 0xc000, scoped, tag = 'input window, operand 0, single buffered']
    #allocation3 [shape = 's32[1]{0}', space=sflag, size = 0x4, scoped, tag = 'scoped memory for tpu_custom_call.1']
    #allocation4 [shape = 's32[1]{0}', space=sflag, size = 0x4, scoped, tag = 'scoped memory for tpu_custom_call.1']
    #allocation5 [shape = 's32[1]{0}', space=sflag, size = 0x4, scoped, tag = 'scoped memory for tpu_custom_call.1']
    #allocation6 [shape = 'u8[4096]{0}', space=vmem, size = 0x1000, scoped, tag = 'input window, operand 1, single buffered']
    #allocation7 [shape = 's32[1]{0}', space=sflag, size = 0x4, scoped, tag = 'scoped memory for tpu_custom_call.1']
    #allocation8 [shape = 'u8[512]{0}', space=smem, size = 0x200, scoped, tag = 'input window, operand 2, single buffered']
    #allocation9 [shape = 'u8[4096]{0}', space=vmem, size = 0x1000, scoped, tag = 'output window, operand 0, single buffered']
    %8 = vsyncpa [#allocation3], 0
    %9 = vsyncpa [#allocation7], 0
    %10 = vsyncpa [#allocation5], 0
    %11 = vsyncpa [#allocation4], 0
    // Predicated region
    $region2: #{tpu_custom_call.1} parent=1 // pred_check
      _
    $region3: #{tpu_custom_call.1} parent=1 // pred_check_branch
      %13 = sbr.rel (0) target = $region5
    $region4: #{tpu_custom_call.1} parent=1 // pred_region
      %s15 = ssub.s32 1536, 1536
      %16 = vsyncadd [#allocation3], %s15
      %s17 = sshll.u32 [#allocation2], 4
      %s18 = int_to_ptr.vmem [resolvable:$true] %s17
      %23 = dma.hbm_to_vmem [thread:$0]  %s0, 1536, %s18, [#allocation3], 128, 128, 8
    $region5: #{tpu_custom_call.1} parent=1 // pred_fallthru
      _
    // Predicated region
    $region6: #{tpu_custom_call.1} parent=1 // pred_check
      _
    $region7: #{tpu_custom_call.1} parent=1 // pred_check_branch
      %25 = sbr.rel (0) target = $region9
    $region8: #{tpu_custom_call.1} parent=1 // pred_region
      %s27 = ssub.s32 128, 128
      %28 = vsyncadd [#allocation7], %s27
      %s30 = sshll.u32 [#allocation6], 4
      %s31 = int_to_ptr.vmem [resolvable:$true] %s30
      %33 = dma.hbm_to_vmem [thread:$0]  %s1, 128, %s31, [#allocation7]
    $region9: #{tpu_custom_call.1} parent=1 // pred_fallthru
      _
    // Predicated region
    $region10: #{tpu_custom_call.1} parent=1 // pred_check
      _
    $region11: #{tpu_custom_call.1} parent=1 // pred_check_branch
      %35 = sbr.rel (0) target = $region13
    $region12: #{tpu_custom_call.1} parent=1 // pred_region
      %s37 = ssub.s32 16, 16
      %38 = vsyncadd [#allocation5], %s37
      %s40 = sshll.u32 %s2, 4
      %s41 = int_to_ptr.vmem [resolvable:$true] %s40
      %43 = dma.vmem_to_smem %s41, 16, [#allocation8], [#allocation5]
    $region13: #{tpu_custom_call.1} parent=1 // pred_fallthru
      _
    // Predicated region
    $region14: #{tpu_custom_call.1} parent=1 // pred_check
      _
    $region15: #{tpu_custom_call.1} parent=1 // pred_check_branch
      %45 = sbr.rel (0) target = $region17
    $region16: #{tpu_custom_call.1} parent=1 // pred_region
      %46 = dma.done [#allocation3], 1536
    $region17: #{tpu_custom_call.1} parent=1 // pred_fallthru
      _
    // Predicated region
    $region18: #{tpu_custom_call.1} parent=1 // pred_check
      _
    $region19: #{tpu_custom_call.1} parent=1 // pred_check_branch
      %48 = sbr.rel (0) target = $region21
    $region20: #{tpu_custom_call.1} parent=1 // pred_region
      %49 = dma.done [#allocation7], 128
    $region21: #{tpu_custom_call.1} parent=1 // pred_fallthru
      _
    // Predicated region
    $region22: #{tpu_custom_call.1} parent=1 // pred_check
      _
    $region23: #{tpu_custom_call.1} parent=1 // pred_check_branch
      %51 = sbr.rel (0) target = $region25
    $region24: #{tpu_custom_call.1} parent=1 // pred_region
      %52 = dma.done [#allocation5], 16
    $region25: #{tpu_custom_call.1} parent=1 // pred_fallthru
      _
    %53 = sfence
    %v54 = vld [vmem:[#allocation2] sm:$0xff]
    %v55 = vld [vmem:[#allocation2 + $0x8] sm:$0xff]
    %v56 = vld [vmem:[#allocation2 + $0x10] sm:$0xff]
    %v57 = vld [vmem:[#allocation2 + $0x18] sm:$0xff]
    %v58 = vld [vmem:[#allocation2 + $0x20] sm:$0xff]
    %v59 = vld [vmem:[#allocation2 + $0x28] sm:$0xff]
    %v60 = vld [vmem:[#allocation2 + $0x30] sm:$0xff]
    %v61 = vld [vmem:[#allocation2 + $0x38] sm:$0xff]
    %v62 = vld [vmem:[#allocation2 + $0x40] sm:$0xff]
    %v63 = vld [vmem:[#allocation2 + $0x48] sm:$0xff]
    %v64 = vld [vmem:[#allocation2 + $0x50] sm:$0xff]
    %v65 = vld [vmem:[#allocation2 + $0x58] sm:$0xff]
    %v66 = vld [vmem:[#allocation6] sm:$0xff]
    %v67 = vunpack.c.0.s8 %v66
    %v68 = vunpack.c.1.s8 %v66
    %v69 = vunpack.c.2.s8 %v66
    %v70 = vunpack.c.3.s8 %v66
    %v71 = vmax.f32 %v54, %v58
    %v72 = vmax.f32 %v55, %v59
    %v73 = vmax.f32 %v56, %v60
    %v74 = vmax.f32 %v57, %v61
    %v75 = vmax.f32 %v71, %v62
    %v76 = vmax.f32 %v72, %v63
    %v77 = vmax.f32 %v73, %v64
    %v78 = vmax.f32 %v74, %v65
    %v79 = vsub.f32 %v54, %v75
    %v80 = vsub.f32 %v55, %v76
    %v81 = vsub.f32 %v56, %v77
    %v82 = vsub.f32 %v57, %v78
    %v83 = vmul.f32 %v79, 1.442695
    %v84 = vpow.pop %v83
    %v85 = vmul.f32 %v80, 1.442695
    %v86 = vpow.pop %v85
    %v87 = vmul.f32 %v81, 1.442695
    %v88 = vpow.pop %v87
    %v89 = vmul.f32 %v82, 1.442695
    %v90 = vpow.pop %v89
    %v91 = vsub.f32 %v58, %v75
    %v92 = vsub.f32 %v59, %v76
    %v93 = vsub.f32 %v60, %v77
    %v94 = vsub.f32 %v61, %v78
    %v95 = vmul.f32 %v91, 1.442695
    %v96 = vpow.pop %v95
    %v97 = vmul.f32 %v92, 1.442695
    %v98 = vpow.pop %v97
    %v99 = vmul.f32 %v93, 1.442695
    %v100 = vpow.pop %v99
    %v101 = vmul.f32 %v94, 1.442695
    %v102 = vpow.pop %v101
    %v103 = vsub.f32 %v62, %v75
    %v104 = vsub.f32 %v63, %v76
    %v105 = vsub.f32 %v64, %v77
    %v106 = vsub.f32 %v65, %v78
    %v107 = vmul.f32 %v103, 1.442695
    %v108 = vpow.pop %v107
    %v109 = vmul.f32 %v104, 1.442695
    %v110 = vpow.pop %v109
    %v111 = vmul.f32 %v105, 1.442695
    %v112 = vpow.pop %v111
    %v113 = vmul.f32 %v106, 1.442695
    %v114 = vpow.pop %v113
    %v115 = vadd.f32 %v84, %v96
    %v116 = vadd.f32 %v86, %v98
    %v117 = vadd.f32 %v88, %v100
    %v118 = vadd.f32 %v90, %v102
    %v119 = vadd.f32 %v115, %v108
    %v120 = vadd.f32 %v116, %v110
    %v121 = vadd.f32 %v117, %v112
    %v122 = vadd.f32 %v118, %v114
    %v123 = vlog2.pop %v119
    %v124 = vmul.f32 %v123, 0.6931472
    %v125 = vlog2.pop %v120
    %v126 = vmul.f32 %v125, 0.6931472
    %v127 = vlog2.pop %v121
    %v128 = vmul.f32 %v127, 0.6931472
    %v129 = vlog2.pop %v122
    %v130 = vmul.f32 %v129, 0.6931472
    %v131 = vsub.f32 %v103, %v124
    %v132 = vsub.f32 %v104, %v126
    %v133 = vsub.f32 %v105, %v128
    %v134 = vsub.f32 %v106, %v130
    %vm135 = vcmp.eq.s32.totalorder %v67, 2
    %vm136 = vcmp.eq.s32.totalorder %v68, 2
    %vm137 = vcmp.eq.s32.totalorder %v69, 2
    %vm138 = vcmp.eq.s32.totalorder %v70, 2
    %s139 = sld [smem:[#allocation8 + $0x2]]
    %v140 = vstv %s139
    %v141 = vsel %vm135, %v140, 0.0
    %v142 = vsel %vm136, %v140, 0.0
    %v143 = vsel %vm137, %v140, 0.0
    %v144 = vsel %vm138, %v140, 0.0
    %vm145 = vcmp.eq.s32.totalorder %v67, 1
    %vm146 = vcmp.eq.s32.totalorder %v68, 1
    %vm147 = vcmp.eq.s32.totalorder %v69, 1
    %vm148 = vcmp.eq.s32.totalorder %v70, 1
    %v149 = vsub.f32 %v91, %v124
    %v150 = vsub.f32 %v92, %v126
    %v151 = vsub.f32 %v93, %v128
    %v152 = vsub.f32 %v94, %v130
    %v153 = vsel %vm145, %v149, %v131
    %v154 = vsel %vm146, %v150, %v132
    %v155 = vsel %vm147, %v151, %v133
    %v156 = vsel %vm148, %v152, %v134
    %v157 = vsel %vm145, %v96, %v108
    %v158 = vsel %vm146, %v98, %v110
    %v159 = vsel %vm147, %v100, %v112
    %v160 = vsel %vm148, %v102, %v114
    %s161 = sld [smem:[#allocation8 + $0x1]]
    %v162 = vstv %s161
    %v163 = vsel %vm145, %v162, %v141
    %v164 = vsel %vm146, %v162, %v142
    %v165 = vsel %vm147, %v162, %v143
    %v166 = vsel %vm148, %v162, %v144
    %vm167 = vcmp.eq.s32.totalorder %v67, 0
    %vm168 = vcmp.eq.s32.totalorder %v68, 0
    %vm169 = vcmp.eq.s32.totalorder %v69, 0
    %vm170 = vcmp.eq.s32.totalorder %v70, 0
    %v171 = vsub.f32 %v79, %v124
    %v172 = vsub.f32 %v80, %v126
    %v173 = vsub.f32 %v81, %v128
    %v174 = vsub.f32 %v82, %v130
    %v175 = vsel %vm167, %v171, %v153
    %v176 = vsel %vm168, %v172, %v154
    %v177 = vsel %vm169, %v173, %v155
    %v178 = vsel %vm170, %v174, %v156
    %v179 = vsel %vm167, %v84, %v157
    %v180 = vsel %vm168, %v86, %v158
    %v181 = vsel %vm169, %v88, %v159
    %v182 = vsel %vm170, %v90, %v160
    %s183 = sld [smem:[#allocation8]]
    %v184 = vstv %s183
    %v185 = vsel %vm167, %v184, %v163
    %v186 = vsel %vm168, %v184, %v164
    %v187 = vsel %vm169, %v184, %v165
    %v188 = vsel %vm170, %v184, %v166
    %v189 = vrcp.pop %v119
    %v190 = vmul.f32 %v179, %v189
    %v191 = vrcp.pop %v120
    %v192 = vmul.f32 %v180, %v191
    %v193 = vrcp.pop %v121
    %v194 = vmul.f32 %v181, %v193
    %v195 = vrcp.pop %v122
    %v196 = vmul.f32 %v182, %v195
    %v197 = vsub.f32 1.0, %v190
    %v198 = vsub.f32 1.0, %v192
    %v199 = vsub.f32 1.0, %v194
    %v200 = vsub.f32 1.0, %v196
    %v201 = vsub.f32 0.0, %v185
    %v202 = vsub.f32 0.0, %v186
    %v203 = vsub.f32 0.0, %v187
    %v204 = vsub.f32 0.0, %v188
    %v205 = vmul.f32 %v197, %v197
    %v206 = vmul.f32 %v198, %v198
    %v207 = vmul.f32 %v199, %v199
    %v208 = vmul.f32 %v200, %v200
    %v209 = vmul.f32 %v201, %v205
    %v210 = vmul.f32 %v202, %v206
    %v211 = vmul.f32 %v203, %v207
    %v212 = vmul.f32 %v204, %v208
    %v213 = vmul.f32 %v209, %v175
    %v214 = vmul.f32 %v210, %v176
    %v215 = vmul.f32 %v211, %v177
    %v216 = vmul.f32 %v212, %v178
    %v217 = vadd.f32 %v213, %v214
    %v218 = vadd.f32 %v217, %v215
    %v219 = vadd.f32 %v218, %v216
    %220 = vst [vmem:[#allocation9] sm:$0xff] %v219
    // Predicated region
    $region26: #{tpu_custom_call.1} parent=1 // pred_check
      _
    $region27: #{tpu_custom_call.1} parent=1 // pred_check_branch
      %222 = sbr.rel (0) target = $region29
    $region28: #{tpu_custom_call.1} parent=1 // pred_region
      %s224 = ssub.s32 128, 128
      %225 = vsyncadd [#allocation4], %s224
      %s227 = sshll.u32 [#allocation9], 4
      %s228 = int_to_ptr.vmem [resolvable:$true] %s227
      %230 = dma.vmem_to_hbm [thread:$0]  %s228, 128, %s3, [#allocation4]
    $region29: #{tpu_custom_call.1} parent=1 // pred_fallthru
      _
    // Predicated region
    $region30: #{tpu_custom_call.1} parent=1 // pred_check
      _
    $region31: #{tpu_custom_call.1} parent=1 // pred_check_branch
      %232 = sbr.rel (0) target = $region33
    $region32: #{tpu_custom_call.1} parent=1 // pred_region
      %233 = dma.done [#allocation4], 128
    $region33: #{tpu_custom_call.1} parent=1 // pred_fallthru
      _
    %234 = vsyncpa [#allocation3], 1
    %235 = vsyncpa [#allocation7], 1
    %236 = vsyncpa [#allocation4], 1
    %237 = vsyncpa [#allocation5], 1

</llo_original>
